<compile_context>
chip_gen: v5e
topology: v5e:2x2
jax: 0.10.0
libtpu: 0.0.40
codegen_flags: <defaults>
</compile_context>

<pallas_src>
import functools

import jax
import jax.numpy as jnp
from jax.experimental import pallas as pl
from jax.experimental.pallas import tpu as pltpu

BN_EPS = 1e-5
_VMEM_LIMIT = 32 * 1024 * 1024   # conservative: fits v5e/v6e/v7x scoped VMEM
_SPLIT_PAD = 8                   # sublane padding per partial-stats split row


# ---------------------------------------------------------------------------
# Pass 1: h = x @ W1 (bias dropped: cancelled by BN mean subtraction);
#         accumulate per-feature sum(h), sum(h*h) into this split's row.
#         Grid = (stats_splits ["parallel"], tiles_per_split ["arbitrary"]).
# ---------------------------------------------------------------------------
def _lin1_stats_kernel(x_ref, w1_ref, sum_ref, ssq_ref):
    h = jnp.dot(x_ref[...], w1_ref[...],
                preferred_element_type=jnp.float32)          # (TILE_N, H) f32

    @pl.when(pl.program_id(1) == 0)
    def _init():
        sum_ref[...] = jnp.zeros_like(sum_ref)
        ssq_ref[...] = jnp.zeros_like(ssq_ref)

    # Only row 0 of this split's 8-row padded block carries data.
    sum_ref[0:1, :] += jnp.sum(h, axis=0, keepdims=True)
    ssq_ref[0:1, :] += jnp.sum(h * h, axis=0, keepdims=True)


# ---------------------------------------------------------------------------
# Pass 2: recompute h = x @ W1, BN1 (folded scale/shift, partials combined in
#         the prologue) + ReLU, z = a @ W2 (staged to HBM as bf16), and
#         accumulate BN2 statistics from the f32 z.
# ---------------------------------------------------------------------------
def _bn1_lin2_stats_kernel(n_total, x_ref, w1_ref, sum1_ref, ssq1_ref,
                           g1_ref, be1_ref, w2_ref,
                           z_ref, sum2_ref, ssq2_ref):
    inv_n = 1.0 / n_total
    # Combine per-split partials (zero rows contribute nothing).
    s1 = jnp.sum(sum1_ref[...], axis=0, keepdims=True)        # (1, H)
    q1 = jnp.sum(ssq1_ref[...], axis=0, keepdims=True)
    mean = s1 * inv_n
    var = jnp.maximum(q1 * inv_n - mean * mean, 0.0)          # clamp cancellation
    scale = g1_ref[...] * jax.lax.rsqrt(var + BN_EPS)
    shift = be1_ref[...] - mean * scale

    h = jnp.dot(x_ref[...], w1_ref[...],
                preferred_element_type=jnp.float32)           # recompute (cheap)
    a = jnp.maximum(h * scale + shift, 0.0)                   # BN1 + ReLU
    z = jnp.dot(a.astype(jnp.bfloat16), w2_ref[...],
                preferred_element_type=jnp.float32)           # (TILE_N, E) f32
    z_ref[...] = z.astype(z_ref.dtype)                        # bf16 staging

    @pl.when(pl.program_id(1) == 0)
    def _init():
        sum2_ref[...] = jnp.zeros_like(sum2_ref)
        ssq2_ref[...] = jnp.zeros_like(ssq2_ref)

    sum2_ref[0:1, :] += jnp.sum(z, axis=0, keepdims=True)     # stats from f32 z
    ssq2_ref[0:1, :] += jnp.sum(z * z, axis=0, keepdims=True)


# ---------------------------------------------------------------------------
# Pass 3: combine BN2 partials, BN2 (folded scale/shift) + ReLU.
#         Pure streaming normalize -> grid axis is "parallel".
# ---------------------------------------------------------------------------
def _bn2_relu_kernel(n_total, z_ref, sum2_ref, ssq2_ref, g2_ref, be2_ref,
                     o_ref):
    inv_n = 1.0 / n_total
    s2 = jnp.sum(sum2_ref[...], axis=0, keepdims=True)
    q2 = jnp.sum(ssq2_ref[...], axis=0, keepdims=True)
    mean = s2 * inv_n
    var = jnp.maximum(q2 * inv_n - mean * mean, 0.0)
    scale = g2_ref[...] * jax.lax.rsqrt(var + BN_EPS)
    shift = be2_ref[...] - mean * scale
    z = z_ref[...].astype(jnp.float32)
    o_ref[...] = jnp.maximum(z * scale + shift, 0.0).astype(o_ref.dtype)


# ---------------------------------------------------------------------------
# Wrapper
# ---------------------------------------------------------------------------
def encoder_forward(x, params, *, tile_n=256, stats_splits=2,
                    vmem_limit_bytes=_VMEM_LIMIT):
    """x: (N, input_dim) float32.  params: dict of weights (see init_params).

    stats_splits: number of independent partial-stat accumulators along the
      leading "parallel" grid axis (2 lets both v7x TensorCores work on the
      heavy matmul+stats passes; harmless on 1-TC chips).
    vmem_limit_bytes: raise toward 64-96 MiB on v5e/v6e for bigger tiles;
      keep <= ~48 MiB on v7x (64 MiB physical VMEM).
    """
    n, d = x.shape
    h_dim = params["w1"].shape[1]
    e_dim = params["w2"].shape[1]

    tile_n = min(tile_n, n)
    assert tile_n % 8 == 0, "tile_n must be a multiple of 8 (sublane tiling)"
    assert n % tile_n == 0, "batch must be a multiple of tile_n (BN stats)"
    num_tiles = n // tile_n
    if num_tiles % stats_splits != 0:
        stats_splits = 1
    tiles_per_split = num_tiles // stats_splits
    n_f = float(n)
    spad = stats_splits * _SPLIT_PAD   # padded rows of the partial-stat arrays

    # bf16 operands for the MXU, cast once here (halves input DMA bytes).
    # b1/b2 intentionally NOT passed: exactly cancelled by training-mode BN.
    x_bf = x.astype(jnp.bfloat16)
    w1 = params["w1"].astype(jnp.bfloat16)
    w2 = params["w2"].astype(jnp.bfloat16)
    g1, be1 = params["g1"], params["be1"]
    g2, be2 = params["g2"], params["be2"]

    # --- BlockSpecs for the 2D (split, tile) grid of passes 1-2 ------------
    row2 = lambda c: pl.BlockSpec(
        (tile_n, c), lambda s, i: (s * tiles_per_split + i, 0))
    vec2 = lambda c: pl.BlockSpec((1, c), lambda s, i: (0, 0))
    full2 = lambda r, c: pl.BlockSpec((r, c), lambda s, i: (0, 0))
    part2 = lambda c: pl.BlockSpec((_SPLIT_PAD, c), lambda s, i: (s, 0))

    # --- BlockSpecs for the 1D grid of pass 3 ------------------------------
    row1 = lambda c: pl.BlockSpec((tile_n, c), lambda i: (i, 0))
    vec1 = lambda c: pl.BlockSpec((1, c), lambda i: (0, 0))
    full1 = lambda r, c: pl.BlockSpec((r, c), lambda i: (0, 0))

    acc_params = pltpu.CompilerParams(
        dimension_semantics=("parallel", "arbitrary"),
        vmem_limit_bytes=vmem_limit_bytes)
    par_params = pltpu.CompilerParams(
        dimension_semantics=("parallel",),
        vmem_limit_bytes=vmem_limit_bytes)

    # ---- Pass 1: Linear1 + BN1 partial statistics (no h written to HBM) ---
    sum1, ssq1 = pl.pallas_call(
        _lin1_stats_kernel,
        grid=(stats_splits, tiles_per_split),
        in_specs=[row2(d), full2(d, h_dim)],
        out_specs=[part2(h_dim), part2(h_dim)],
        out_shape=[jax.ShapeDtypeStruct((spad, h_dim), jnp.float32),
                   jax.ShapeDtypeStruct((spad, h_dim), jnp.float32)],
        compiler_params=acc_params,
    )(x_bf, w1)

    # ---- Pass 2: recompute Lin1, BN1+ReLU, Linear2, BN2 partial stats -----
    z, sum2, ssq2 = pl.pallas_call(
        functools.partial(_bn1_lin2_stats_kernel, n_f),
        grid=(stats_splits, tiles_per_split),
        in_specs=[row2(d), full2(d, h_dim),
                  full2(spad, h_dim), full2(spad, h_dim),
                  vec2(h_dim), vec2(h_dim), full2(h_dim, e_dim)],
        out_specs=[row2(e_dim), part2(e_dim), part2(e_dim)],
        out_shape=[jax.ShapeDtypeStruct((n, e_dim), jnp.bfloat16),  # bf16 stage
                   jax.ShapeDtypeStruct((spad, e_dim), jnp.float32),
                   jax.ShapeDtypeStruct((spad, e_dim), jnp.float32)],
        compiler_params=acc_params,
    )(x_bf, w1, sum1, ssq1, g1, be1, w2)

    # ---- Pass 3: BN2 + ReLU ------------------------------------------------
    out = pl.pallas_call(
        functools.partial(_bn2_relu_kernel, n_f),
        grid=(num_tiles,),
        in_specs=[row1(e_dim), full1(spad, e_dim), full1(spad, e_dim),
                  vec1(e_dim), vec1(e_dim)],
        out_specs=row1(e_dim),
        out_shape=jax.ShapeDtypeStruct((n, e_dim), jnp.float32),
        compiler_params=par_params,
    )(z, sum2, ssq2, g2, be2)

    return out


# ---------------------------------------------------------------------------
# Params / reference
# ---------------------------------------------------------------------------
def init_params(key, input_dim, hidden, emb):
    k1, k2, k3, k4 = jax.random.split(key, 4)
    w1 = jax.random.uniform(k1, (input_dim, hidden), jnp.float32, -0.1, 0.1)
    b1 = jax.random.uniform(k2, (1, hidden), jnp.float32, -0.1, 0.1)
    w2 = jax.random.uniform(k3, (hidden, emb), jnp.float32, -0.1, 0.1)
    b2 = jax.random.uniform(k4, (1, emb), jnp.float32, -0.1, 0.1)
    g1 = jnp.ones((1, hidden), jnp.float32)
    be1 = jnp.zeros((1, hidden), jnp.float32)
    g2 = jnp.ones((1, emb), jnp.float32)
    be2 = jnp.zeros((1, emb), jnp.float32)
    return dict(w1=w1, b1=b1, g1=g1, be1=be1, w2=w2, b2=b2, g2=g2, be2=be2)


def encoder_reference(x, p, matmul_dtype=jnp.float32, stage_dtype=None):
    """Pure-JAX reference matching the PyTorch forward (training-mode BN).

    matmul_dtype / stage_dtype let us build a reference that sees the same
    bf16 matmul operands and bf16 z-staging as the kernel, for a tight check.
    """
    def mm(a, w):
        return jnp.dot(a.astype(matmul_dtype), w.astype(matmul_dtype),
                       preferred_element_type=jnp.float32)

    def bn(v, g, b):
        m = v.mean(axis=0, keepdims=True)
        va = ((v - m) ** 2).mean(axis=0, keepdims=True)
        return (v - m) / jnp.sqrt(va + BN_EPS) * g + b

    h = mm(x, p["w1"]) + p["b1"]
    h = jnp.maximum(bn(h, p["g1"], p["be1"]), 0.0)
    z = mm(h, p["w2"]) + p["b2"]
    if stage_dtype is not None:
        z = z.astype(stage_dtype).astype(jnp.float32)
    return jnp.maximum(bn(z, p["g2"], p["be2"]), 0.0)


if __name__ == "__main__":
    key = jax.random.PRNGKey(0)
    kx, kp = jax.random.split(key)

    # Small but lane-dense demo shapes (feature dims multiples of 128,
    # batch a multiple of the batch tile so BN stats tile cleanly).
    batch, input_dim, hidden, emb = 512, 128, 256, 128
    x = jax.random.normal(kx, (batch, input_dim), jnp.float32)
    params = init_params(kp, input_dim, hidden, emb)

    out = jax.block_until_ready(
        encoder_forward(x, params, tile_n=256, stats_splits=2))
    assert out.shape == (batch, emb)

    # Tight structural check vs. a reference matching the kernel's bf16 MXU
    # operands and bf16 z staging (BN / ReLU math in f32 in both).
    ref_matched = encoder_reference(x, params, matmul_dtype=jnp.bfloat16,
                                    stage_dtype=jnp.bfloat16)
    assert jnp.allclose(out, ref_matched, atol=2e-2, rtol=1e-2), \
        "mismatch vs matched-precision reference"

    # Fidelity check vs. the exact f32 PyTorch-style forward; looser tolerance
    # only accounts for bf16 MXU operands / bf16 z staging.
    ref_f32 = encoder_reference(x, params, matmul_dtype=jnp.float32)
    assert jnp.allclose(out, ref_f32, atol=1e-1, rtol=1e-1), \
        "mismatch vs f32 reference"

    print("KERNEL_OK")
</pallas_src>

<mosaic_0001>
module attributes {stable_mosaic.version = 11 : i64} {
  func.func @_lin1_stats_kernel(%arg0: i32, %arg1: i32, %arg2: memref<256x128xbf16, #tpu.memory_space<vmem>>, %arg3: memref<128x256xbf16, #tpu.memory_space<vmem>>, %arg4: memref<8x256xf32, #tpu.memory_space<vmem>>, %arg5: memref<8x256xf32, #tpu.memory_space<vmem>>) attributes {dimension_semantics = [#tpu.dimension_semantics<parallel>, #tpu.dimension_semantics<arbitrary>], iteration_bounds = array<i64: 2, 1>, scalar_prefetch = 0 : i64, scratch_operands = 0 : i64, tpu.core_type = #tpu.core_type<tc>, window_params = [{transform_indices = @transform_0, window_bounds = array<i64: 256, 128>}, {pipeline_mode = #tpu.pipeline_mode<synchronous>, transform_indices = @transform_1, window_bounds = array<i64: 128, 256>}, {transform_indices = @transform_2, window_bounds = array<i64: 8, 256>}, {transform_indices = @transform_3, window_bounds = array<i64: 8, 256>}]} {
    %c0 = arith.constant 0 : index
    %c0_0 = arith.constant 0 : index
    %0 = vector.load %arg2[%c0, %c0_0] : memref<256x128xbf16, #tpu.memory_space<vmem>>, vector<256x128xbf16>
    %c0_1 = arith.constant 0 : index
    %c0_2 = arith.constant 0 : index
    %1 = vector.load %arg3[%c0_1, %c0_2] : memref<128x256xbf16, #tpu.memory_space<vmem>>, vector<128x256xbf16>
    %cst = arith.constant dense<0.000000e+00> : vector<256x256xf32>
    %2 = tpu.matmul %0, %1, %cst {dimension_numbers = #tpu.dot_dimension_numbers<[1], [0], [0], [1], [0, 0, 1, 1], [], []>} : vector<256x128xbf16>, vector<128x256xbf16>, vector<256x256xf32> -> vector<256x256xf32>
    %c0_i32 = arith.constant 0 : i32
    %3 = arith.cmpi eq, %arg1, %c0_i32 : i32
    %4 = arith.extui %3 : i1 to i32
    %c0_i32_3 = arith.constant 0 : i32
    %5 = arith.cmpi ne, %4, %c0_i32_3 : i32
    scf.if %5 {
      %cst_14 = arith.constant 0.000000e+00 : f32
      %17 = vector.broadcast %cst_14 : f32 to vector<8x256xf32>
      %c0_15 = arith.constant 0 : index
      %c0_16 = arith.constant 0 : index
      %18 = vector.load %arg4[%c0_15, %c0_16] : memref<8x256xf32, #tpu.memory_space<vmem>>, vector<8x256xf32>
      tpu.vector_store %arg4[%c0_15, %c0_16], %17 {strides = array<i32>} : memref<8x256xf32, #tpu.memory_space<vmem>>, vector<8x256xf32>,
      %cst_17 = arith.constant 0.000000e+00 : f32
      %19 = vector.broadcast %cst_17 : f32 to vector<8x256xf32>
      %c0_18 = arith.constant 0 : index
      %c0_19 = arith.constant 0 : index
      %20 = vector.load %arg5[%c0_18, %c0_19] : memref<8x256xf32, #tpu.memory_space<vmem>>, vector<8x256xf32>
      tpu.vector_store %arg5[%c0_18, %c0_19], %19 {strides = array<i32>} : memref<8x256xf32, #tpu.memory_space<vmem>>, vector<8x256xf32>,
    } else {
    }
    %c0_4 = arith.constant 0 : index
    %c0_5 = arith.constant 0 : index
    %6 = vector.load %arg4[%c0_4, %c0_5] : memref<8x256xf32, #tpu.memory_space<vmem>>, vector<1x256xf32>
    %cst_6 = arith.constant dense<0.000000e+00> : vector<256xf32>
    %7 = vector.multi_reduction <add>, %2, %cst_6 [0] : vector<256x256xf32> to vector<256xf32>
    %8 = vector.shape_cast %7 : vector<256xf32> to vector<1x256xf32>
    %9 = arith.addf %6, %8 : vector<1x256xf32>
    %c0_7 = arith.constant 0 : index
    %c0_8 = arith.constant 0 : index
    %10 = vector.load %arg4[%c0_7, %c0_8] : memref<8x256xf32, #tpu.memory_space<vmem>>, vector<1x256xf32>
    tpu.vector_store %arg4[%c0_7, %c0_8], %9 {strides = array<i32>} : memref<8x256xf32, #tpu.memory_space<vmem>>, vector<1x256xf32>,
    %c0_9 = arith.constant 0 : index
    %c0_10 = arith.constant 0 : index
    %11 = vector.load %arg5[%c0_9, %c0_10] : memref<8x256xf32, #tpu.memory_space<vmem>>, vector<1x256xf32>
    %12 = arith.mulf %2, %2 : vector<256x256xf32>
    %cst_11 = arith.constant dense<0.000000e+00> : vector<256xf32>
    %13 = vector.multi_reduction <add>, %12, %cst_11 [0] : vector<256x256xf32> to vector<256xf32>
    %14 = vector.shape_cast %13 : vector<256xf32> to vector<1x256xf32>
    %15 = arith.addf %11, %14 : vector<1x256xf32>
    %c0_12 = arith.constant 0 : index
    %c0_13 = arith.constant 0 : index
    %16 = vector.load %arg5[%c0_12, %c0_13] : memref<8x256xf32, #tpu.memory_space<vmem>>, vector<1x256xf32>
    tpu.vector_store %arg5[%c0_12, %c0_13], %15 {strides = array<i32>} : memref<8x256xf32, #tpu.memory_space<vmem>>, vector<1x256xf32>,
    return
  }
  func.func @transform_0(%arg0: i32, %arg1: i32) -> (i32, i32) {
    %c1_i32 = arith.constant 1 : i32
    %0 = arith.muli %arg0, %c1_i32 : i32
    %1 = arith.addi %0, %arg1 : i32
    %c0_i32 = arith.constant 0 : i32
    %c0_i32_0 = arith.constant 0 : i32
    return %1, %c0_i32 : i32, i32
  }
  func.func @transform_1(%arg0: i32, %arg1: i32) -> (i32, i32) {
    %c0_i32 = arith.constant 0 : i32
    %c0_i32_0 = arith.constant 0 : i32
    %c0_i32_1 = arith.constant 0 : i32
    return %c0_i32, %c0_i32_0 : i32, i32
  }
  func.func @transform_2(%arg0: i32, %arg1: i32) -> (i32, i32) {
    %c0_i32 = arith.constant 0 : i32
    %c0_i32_0 = arith.constant 0 : i32
    return %arg0, %c0_i32 : i32, i32
  }
  func.func @transform_3(%arg0: i32, %arg1: i32) -> (i32, i32) {
    %c0_i32 = arith.constant 0 : i32
    %c0_i32_0 = arith.constant 0 : i32
    return %arg0, %c0_i32 : i32, i32
  }
}

</mosaic_0001>

<llo_original>
// kernel: tpu_custom_call.1
$region0: #{tpu_custom_call.1}
  #allocation0 [shape = 'u32[]', space=smem, size = 0x4, offset = 0x4, fixed_abs, tag = 'smem constant byte address 0x4 - core index']
  #allocation1 [shape = 'u32[72,128]{1,0:T(1,128)}', space=vmem, size = 0x9000, scoped, tag = 'internal scratch']
  %s0 = inlined_call_operand.hbm [shape: bf16[512,128], index: 0, kind: input, shape index: {}]
  %s1 = inlined_call_operand.hbm [shape: bf16[128,256], index: 1, kind: input, shape index: {}]
  %s2 = inlined_call_operand.hbm [shape: f32[16,256], index: 2, kind: output, shape index: {0}]
  %s3 = inlined_call_operand.hbm [shape: f32[16,256], index: 3, kind: output, shape index: {1}]
  %4 = xla_tuple %s2, %s3
  %s5 = sld [smem:[#allocation0]]
  $region61: #{tpu_custom_call.1} parent=0
    _
  %s7 = ssub.s32 1, %s5
  %s8 = scalar_select 0, %s7, %s5
  $region1: #{tpu_custom_call.1} parent=0
    #allocation2 [shape = 'u8[131072]{0}', space=vmem, size = 0x20000, scoped, tag = 'input window, operand 0']
    #allocation3 [shape = 's32[2]{0}', space=sflag, size = 0x8, scoped, tag = 'scoped memory for tpu_custom_call.1']
    #allocation4 [shape = 's32[2]{0}', space=sflag, size = 0x8, scoped, tag = 'scoped memory for tpu_custom_call.1']
    #allocation5 [shape = 'u8[65536]{0}', space=vmem, size = 0x10000, scoped, tag = 'input window, operand 1, single buffered']
    #allocation6 [shape = 's32[1]{0}', space=sflag, size = 0x4, scoped, tag = 'scoped memory for tpu_custom_call.1']
    #allocation7 [shape = 'u8[16384]{0}', space=vmem, size = 0x4000, scoped, tag = 'output window, operand 0']
    #allocation8 [shape = 'u8[16384]{0}', space=vmem, size = 0x4000, scoped, tag = 'output window, operand 1']
    #allocation9 [shape = 's32[2]{0}', space=sflag, size = 0x8, scoped, tag = 'scoped memory for tpu_custom_call.1']
    %9 = vsyncpa [#allocation3], 0
    %s10 = scalar_lea.sflag [#allocation3], 1
    %11 = vsyncpa %s10, 0
    %12 = vsyncpa [#allocation6], 0
    %13 = vsyncpa [#allocation4], 0
    %s14 = scalar_lea.sflag [#allocation4], 1
    %15 = vsyncpa %s14, 0
    %16 = vsyncpa [#allocation9], 0
    %s17 = scalar_lea.sflag [#allocation9], 1
    %18 = vsyncpa %s17, 0
    loop: start=0, step=1, limit=4
    $region2: #{tpu_custom_call.1} parent=1 // loop_pre_header
      _
    $region3: #{tpu_custom_call.1} parent=1 // loop_header
      %s20 = sphi 0, %s24
      %p21 = scmp.ge.s32.totalorder %s20, 4
      %s27 = sphi 0, %s39
      %s28 = sphi 0, %s35
      %s29 = sphi 0, %s27
      %s30 = sphi 0, %s28
      %s31 = sphi 0, %s29
      %s32 = sphi 0, %s30
      %s44 = sphi 0, %s46
      %s47 = sphi 0, %s44
      %s48 = sphi 0, %s47
      %s64 = sphi 0, %s48
      %s68 = sphi 0, %s68
      %s70 = sphi 0, %s68
      %s71 = sphi 0, %s70
      %s85 = sphi 0, %s71
      %s91 = sphi 0, %s93
      %s94 = sphi 0, %s91
      %s95 = sphi 0, %s94
      %s111 = sphi 0, %s95
      %s117 = sphi 0, %s119
      %s120 = sphi 0, %s117
      %s121 = sphi 0, %s120
      %s137 = sphi 0, %s121
    $region4: #{tpu_custom_call.1} parent=1 // loop_header_branch
      %23 = sbr.rel (%p21) target = $region8
    $region5: #{tpu_custom_call.1} parent=1 // loop_body
      %s25 = ssub.s32 %s20, 1
      %s26 = ssub.s32 %s20, 2
      %s33 = sadd.s32 1, %s28
      %p34 = scmp.ge.s32.totalorder %s33, 1
      %s35 = scalar_select %p34, 0, %s33
      %s36 = sadd.s32 1, %s27
      %s37 = scalar_select %p34, %s36, %s27
      %p38 = scmp.ge.s32.totalorder %s37, 2
      %s39 = scalar_select %p38, 0, %s37
      %s40 = sadd.s32 %s27, %s28
      %s41 = sadd.s32 %s39, %s35
      %s42 = ssub.s32 %s40, %s41
      %p43 = scmp.eq.s32.totalorder %s42, 0
      %s45 = sadd.s32 %s44, 1
      %s46 = scalar_select %p43, %s44, %s45
      %p49 = pneg %p43
      %p50 = scmp.eq.s32.totalorder %s20, 1
      %p51 = por %p49, %p50
      %p52 = scmp.ne.s32.totalorder %s44, %s47
      %p53 = scmp.eq.s32.totalorder %s20, 0
      %p54 = por %p52, %p53
      %p55 = scmp.ne.s32.totalorder %s44, %s47
      %p56 = scmp.eq.s32.totalorder %s25, 1
      %p57 = por %p55, %p56
      %p58 = scmp.ne.s32.totalorder %s47, %s48
      %p59 = scmp.eq.s32.totalorder %s25, 0
      %p60 = por %p58, %p59
      %p61 = scmp.ne.s32.totalorder %s47, %s48
      %p62 = scmp.eq.s32.totalorder %s26, 1
      %p63 = por %p61, %p62
      %p65 = scmp.ne.s32.totalorder %s48, %s64
      %p66 = scmp.eq.s32.totalorder %s26, 0
      %p67 = por %p65, %p66
      %s69 = sadd.s32 %s68, 1
      %p72 = scmp.eq.s32.totalorder %s20, 1
      %p73 = scmp.ne.s32.totalorder %s68, %s70
      %p74 = scmp.eq.s32.totalorder %s20, 0
      %p75 = por %p73, %p74
      %p76 = scmp.ne.s32.totalorder %s68, %s70
      %p77 = scmp.eq.s32.totalorder %s25, 1
      %p78 = por %p76, %p77
      %p79 = scmp.ne.s32.totalorder %s70, %s71
      %p80 = scmp.eq.s32.totalorder %s25, 0
      %p81 = por %p79, %p80
      %p82 = scmp.ne.s32.totalorder %s70, %s71
      %p83 = scmp.eq.s32.totalorder %s26, 1
      %p84 = por %p82, %p83
      %p86 = scmp.ne.s32.totalorder %s71, %s85
      %p87 = scmp.eq.s32.totalorder %s26, 0
      %p88 = por %p86, %p87
      %s89 = ssub.s32 %s27, %s39
      %p90 = scmp.eq.s32.totalorder %s89, 0
      %s92 = sadd.s32 %s91, 1
      %s93 = scalar_select %p90, %s91, %s92
      %p96 = pneg %p90
      %p97 = scmp.eq.s32.totalorder %s20, 1
      %p98 = por %p96, %p97
      %p99 = scmp.ne.s32.totalorder %s91, %s94
      %p100 = scmp.eq.s32.totalorder %s20, 0
      %p101 = por %p99, %p100
      %p102 = scmp.ne.s32.totalorder %s91, %s94
      %p103 = scmp.eq.s32.totalorder %s25, 1
      %p104 = por %p102, %p103
      %p105 = scmp.ne.s32.totalorder %s94, %s95
      %p106 = scmp.eq.s32.totalorder %s25, 0
      %p107 = por %p105, %p106
      %p108 = scmp.ne.s32.totalorder %s94, %s95
      %p109 = scmp.eq.s32.totalorder %s26, 1
      %p110 = por %p108, %p109
      %p112 = scmp.ne.s32.totalorder %s95, %s111
      %p113 = scmp.eq.s32.totalorder %s26, 0
      %p114 = por %p112, %p113
      %s115 = ssub.s32 %s27, %s39
      %p116 = scmp.eq.s32.totalorder %s115, 0
      %s118 = sadd.s32 %s117, 1
      %s119 = scalar_select %p116, %s117, %s118
      %p122 = pneg %p116
      %p123 = scmp.eq.s32.totalorder %s20, 1
      %p124 = por %p122, %p123
      %p125 = scmp.ne.s32.totalorder %s117, %s120
      %p126 = scmp.eq.s32.totalorder %s20, 0
      %p127 = por %p125, %p126
      %p128 = scmp.ne.s32.totalorder %s117, %s120
      %p129 = scmp.eq.s32.totalorder %s25, 1
      %p130 = por %p128, %p129
      %p131 = scmp.ne.s32.totalorder %s120, %s121
      %p132 = scmp.eq.s32.totalorder %s25, 0
      %p133 = por %p131, %p132
      %p134 = scmp.ne.s32.totalorder %s120, %s121
      %p135 = scmp.eq.s32.totalorder %s26, 1
      %p136 = por %p134, %p135
      %p138 = scmp.ne.s32.totalorder %s121, %s137
      %p139 = scmp.eq.s32.totalorder %s26, 0
      %p140 = por %p138, %p139
      %p141 = scmp.le.s32.totalorder 1, %s20
      %p142 = scmp.lt.s32.totalorder %s20, 3
      %p143 = pnand %p141, %p142
      %p144 = pneg %p143
      // Predicated region
      $region9: #{tpu_custom_call.1} parent=5 // pred_check
        _
      $region10: #{tpu_custom_call.1} parent=5 // pred_check_branch
        %146 = sbr.rel (%p143) target = $region12
      $region11: #{tpu_custom_call.1} parent=5 // pred_region
        %s147 = ssub.s32 %s20, 1
        // Predicated region
        $region13: #{tpu_custom_call.1} parent=11 // pred_check
          %p148 = pneg %p81
        $region14: #{tpu_custom_call.1} parent=11 // pred_check_branch
          %150 = sbr.rel (%p148) target = $region16
        $region15: #{tpu_custom_call.1} parent=11 // pred_region
          %152 = vsyncadd [#allocation6], 0
          %s153 = sshll.u32 %s1, 4
          %s154 = int_to_ptr.hbm [resolvable:$true] %s153
          %s155 = sshll.u32 [#allocation5], 4
          %s156 = int_to_ptr.vmem [resolvable:$true] %s155
          %161 = dma.hbm_to_vmem [thread:$0]  %s154, 2048, %s156, [#allocation6], 128, 128, 8
        $region16: #{tpu_custom_call.1} parent=11 // pred_fallthru
          _
      $region12: #{tpu_custom_call.1} parent=5 // pred_fallthru
        _
      %p162 = scmp.lt.s32.totalorder %s20, 2
      // Predicated region
      $region17: #{tpu_custom_call.1} parent=5 // pred_check
        %p163 = pneg %p162
      $region18: #{tpu_custom_call.1} parent=5 // pred_check_branch
        %165 = sbr.rel (%p163) target = $region20
      $region19: #{tpu_custom_call.1} parent=5 // pred_region
        // Predicated region
        $region21: #{tpu_custom_call.1} parent=19 // pred_check
          %p166 = pneg %p54
        $region22: #{tpu_custom_call.1} parent=19 // pred_check_branch
          %168 = sbr.rel (%p166) target = $region24
        $region23: #{tpu_custom_call.1} parent=19 // pred_region
          %s169 = sand.u32 %s44, 1
          %s170 = scalar_lea.sflag [#allocation3], %s169
          %s171 = sand.u32 %s44, 1
          %s172 = smul.addr %s171, 128
          %s173 = scalar_lea.vmem [#allocation2], %s172
          %s174 = sadd.s32 %s27, %s28
          %s175 = smul.u32 32, %s174
          %177 = vsyncadd %s170, 0
          %s178 = smul.addr %s175, 4
          %s179 = scalar_lea.hbm %s0, %s178
          %s180 = sshll.u32 %s179, 4
          %s181 = int_to_ptr.hbm [resolvable:$true] %s180
          %s182 = sshll.u32 %s173, 4
          %s183 = int_to_ptr.vmem [resolvable:$true] %s182
          %188 = dma.hbm_to_vmem [thread:$0]  %s181, 2048, %s183, %s170, 64, 64, 4
        $region24: #{tpu_custom_call.1} parent=19 // pred_fallthru
          _
      $region20: #{tpu_custom_call.1} parent=5 // pred_fallthru
        _
      %p189 = scmp.le.s32.totalorder 1, %s20
      %p190 = scmp.lt.s32.totalorder %s20, 3
      %p191 = pnand %p189, %p190
      %p192 = pneg %p191
      // Predicated region
      $region25: #{tpu_custom_call.1} parent=5 // pred_check
        _
      $region26: #{tpu_custom_call.1} parent=5 // pred_check_branch
        %194 = sbr.rel (%p191) target = $region28
      $region27: #{tpu_custom_call.1} parent=5 // pred_region
        %s195 = ssub.s32 %s20, 1
        %s196 = sand.u32 %s47, 1
        %s197 = scalar_lea.sflag [#allocation3], %s196
        %s198 = sand.u32 %s47, 1
        %s199 = smul.addr %s198, 128
        %s200 = scalar_lea.vmem [#allocation2], %s199
        // Predicated region
        $region29: #{tpu_custom_call.1} parent=27 // pred_check
          %p201 = pneg %p60
        $region30: #{tpu_custom_call.1} parent=27 // pred_check_branch
          %203 = sbr.rel (%p201) target = $region32
        $region31: #{tpu_custom_call.1} parent=27 // pred_region
          %205 = dma.done %s197, 2048
        $region32: #{tpu_custom_call.1} parent=27 // pred_fallthru
          _
        // Predicated region
        $region33: #{tpu_custom_call.1} parent=27 // pred_check
          %p206 = pneg %p81
        $region34: #{tpu_custom_call.1} parent=27 // pred_check_branch
          %208 = sbr.rel (%p206) target = $region36
        $region35: #{tpu_custom_call.1} parent=27 // pred_region
          %210 = dma.done [#allocation6], 2048
        $region36: #{tpu_custom_call.1} parent=27 // pred_fallthru
          _
        %s211 = sand.u32 %s47, 1
        %s212 = scalar_lea.sflag [#allocation3], %s211
        %s213 = sand.u32 %s47, 1
        %s214 = smul.addr %s213, 128
        %s215 = scalar_lea.vmem [#allocation2], %s214
        %p216 = pneg %p60
        %p217 = pneg %p57
        %p218 = pneg %p81
        %p219 = pneg %p78
        %p220 = pneg %p107
        %p221 = pneg %p104
        %s222 = sand.u32 %s94, 1
        %s223 = scalar_lea.sflag [#allocation4], %s222
        %s224 = sand.u32 %s94, 1
        %s225 = smul.addr %s224, 16
        %s226 = scalar_lea.vmem [#allocation7], %s225
        %p227 = pneg %p133
        %p228 = pneg %p130
        %s229 = sand.u32 %s120, 1
        %s230 = scalar_lea.sflag [#allocation9], %s229
        %s231 = sand.u32 %s120, 1
        %s232 = smul.addr %s231, 16
        %s233 = scalar_lea.vmem [#allocation8], %s232
        %s234 = sadd.s32 %s29, %s30
        %s235 = smul.u32 32, %s234
        %v236 = vld [vmem:[%s200] sm:$0xf]
        %v237 = vld [vmem:[%s200 + $0x4] sm:$0xf]
        %v238 = vld [vmem:[%s200 + $0x8] sm:$0xf]
        %v239 = vld [vmem:[%s200 + $0xc] sm:$0xf]
        %v240 = vld [vmem:[%s200 + $0x10] sm:$0xf]
        %v241 = vld [vmem:[%s200 + $0x14] sm:$0xf]
        %v242 = vld [vmem:[%s200 + $0x18] sm:$0xf]
        %v243 = vld [vmem:[%s200 + $0x1c] sm:$0xf]
        %v244 = vld [vmem:[%s200 + $0x20] sm:$0xf]
        %v245 = vld [vmem:[%s200 + $0x24] sm:$0xf]
        %v246 = vld [vmem:[%s200 + $0x28] sm:$0xf]
        %v247 = vld [vmem:[%s200 + $0x2c] sm:$0xf]
        %v248 = vld [vmem:[%s200 + $0x30] sm:$0xf]
        %v249 = vld [vmem:[%s200 + $0x34] sm:$0xf]
        %v250 = vld [vmem:[%s200 + $0x38] sm:$0xf]
        %v251 = vld [vmem:[%s200 + $0x3c] sm:$0xf]
        %v252 = vld [vmem:[%s200 + $0x40] sm:$0xf]
        %v253 = vld [vmem:[%s200 + $0x44] sm:$0xf]
        %v254 = vld [vmem:[%s200 + $0x48] sm:$0xf]
        %v255 = vld [vmem:[%s200 + $0x4c] sm:$0xf]
        %v256 = vld [vmem:[%s200 + $0x50] sm:$0xf]
        %v257 = vld [vmem:[%s200 + $0x54] sm:$0xf]
        %v258 = vld [vmem:[%s200 + $0x58] sm:$0xf]
        %v259 = vld [vmem:[%s200 + $0x5c] sm:$0xf]
        %v260 = vld [vmem:[%s200 + $0x60] sm:$0xf]
        %v261 = vld [vmem:[%s200 + $0x64] sm:$0xf]
        %v262 = vld [vmem:[%s200 + $0x68] sm:$0xf]
        %v263 = vld [vmem:[%s200 + $0x6c] sm:$0xf]
        %v264 = vld [vmem:[%s200 + $0x70] sm:$0xf]
        %v265 = vld [vmem:[%s200 + $0x74] sm:$0xf]
        %v266 = vld [vmem:[%s200 + $0x78] sm:$0xf]
        %v267 = vld [vmem:[%s200 + $0x7c] sm:$0xf]
        %v268 = vld [vmem:[#allocation5] sm:$0xff]
        %v269 = vld [vmem:[#allocation5 + $0x8] sm:$0xff]
        %v270 = vld [vmem:[#allocation5 + $0x10] sm:$0xff]
        %v271 = vld [vmem:[#allocation5 + $0x18] sm:$0xff]
        %v272 = vld [vmem:[#allocation5 + $0x20] sm:$0xff]
        %v273 = vld [vmem:[#allocation5 + $0x28] sm:$0xff]
        %v274 = vld [vmem:[#allocation5 + $0x30] sm:$0xff]
        %v275 = vld [vmem:[#allocation5 + $0x38] sm:$0xff]
        %v276 = vld [vmem:[#allocation5 + $0x40] sm:$0xff]
        %v277 = vld [vmem:[#allocation5 + $0x48] sm:$0xff]
        %v278 = vld [vmem:[#allocation5 + $0x50] sm:$0xff]
        %v279 = vld [vmem:[#allocation5 + $0x58] sm:$0xff]
        %v280 = vld [vmem:[#allocation5 + $0x60] sm:$0xff]
        %v281 = vld [vmem:[#allocation5 + $0x68] sm:$0xff]
        %v282 = vld [vmem:[#allocation5 + $0x70] sm:$0xff]
        %v283 = vld [vmem:[#allocation5 + $0x78] sm:$0xff]
        %v316 = vunpack.c.l.b16 %v236
        %v317 = vunpack.c.l.b16 %v237
        %v318 = vunpack.c.l.b16 %v238
        %v319 = vunpack.c.l.b16 %v239
        %v320 = vunpack.c.l.b16 %v240
        %v321 = vunpack.c.l.b16 %v241
        %v322 = vunpack.c.l.b16 %v242
        %v323 = vunpack.c.l.b16 %v243
        %v324 = vunpack.c.l.b16 %v244
        %v325 = vunpack.c.l.b16 %v245
        %v326 = vunpack.c.l.b16 %v246
        %v327 = vunpack.c.l.b16 %v247
        %v328 = vunpack.c.l.b16 %v248
        %v329 = vunpack.c.l.b16 %v249
        %v330 = vunpack.c.l.b16 %v250
        %v331 = vunpack.c.l.b16 %v251
        %v332 = vunpack.c.l.b16 %v252
        %v333 = vunpack.c.l.b16 %v253
        %v334 = vunpack.c.l.b16 %v254
        %v335 = vunpack.c.l.b16 %v255
        %v336 = vunpack.c.l.b16 %v256
        %v337 = vunpack.c.l.b16 %v257
        %v338 = vunpack.c.l.b16 %v258
        %v339 = vunpack.c.l.b16 %v259
        %v340 = vunpack.c.l.b16 %v260
        %v341 = vunpack.c.l.b16 %v261
        %v342 = vunpack.c.l.b16 %v262
        %v343 = vunpack.c.l.b16 %v263
        %v344 = vunpack.c.l.b16 %v264
        %v345 = vunpack.c.l.b16 %v265
        %v346 = vunpack.c.l.b16 %v266
        %v347 = vunpack.c.l.b16 %v267
        %v348 = vpack.c.b16 %v317, %v316
        %v349 = vpack.c.b16 %v319, %v318
        %v350 = vpack.c.b16 %v321, %v320
        %v351 = vpack.c.b16 %v323, %v322
        %v352 = vpack.c.b16 %v325, %v324
        %v353 = vpack.c.b16 %v327, %v326
        %v354 = vpack.c.b16 %v329, %v328
        %v355 = vpack.c.b16 %v331, %v330
        %v356 = vpack.c.b16 %v333, %v332
        %v357 = vpack.c.b16 %v335, %v334
        %v358 = vpack.c.b16 %v337, %v336
        %v359 = vpack.c.b16 %v339, %v338
        %v360 = vpack.c.b16 %v341, %v340
        %v361 = vpack.c.b16 %v343, %v342
        %v362 = vpack.c.b16 %v345, %v344
        %v363 = vpack.c.b16 %v347, %v346
        %v396 = vunpack.c.l.b16 %v268
        %v397 = vunpack.c.h.b16 %v268
        %v398 = vunpack.c.l.b16 %v269
        %v399 = vunpack.c.h.b16 %v269
        %v400 = vunpack.c.l.b16 %v270
        %v401 = vunpack.c.h.b16 %v270
        %v402 = vunpack.c.l.b16 %v271
        %v403 = vunpack.c.h.b16 %v271
        %v404 = vunpack.c.l.b16 %v272
        %v405 = vunpack.c.h.b16 %v272
        %v406 = vunpack.c.l.b16 %v273
        %v407 = vunpack.c.h.b16 %v273
        %v408 = vunpack.c.l.b16 %v274
        %v409 = vunpack.c.h.b16 %v274
        %v410 = vunpack.c.l.b16 %v275
        %v411 = vunpack.c.h.b16 %v275
        %v412 = vunpack.c.l.b16 %v276
        %v413 = vunpack.c.h.b16 %v276
        %v414 = vunpack.c.l.b16 %v277
        %v415 = vunpack.c.h.b16 %v277
        %v416 = vunpack.c.l.b16 %v278
        %v417 = vunpack.c.h.b16 %v278
        %v418 = vunpack.c.l.b16 %v279
        %v419 = vunpack.c.h.b16 %v279
        %v420 = vunpack.c.l.b16 %v280
        %v421 = vunpack.c.h.b16 %v280
        %v422 = vunpack.c.l.b16 %v281
        %v423 = vunpack.c.h.b16 %v281
        %v424 = vunpack.c.l.b16 %v282
        %v425 = vunpack.c.h.b16 %v282
        %v426 = vunpack.c.l.b16 %v283
        %v427 = vunpack.c.h.b16 %v283
        %v428 = vpack.c.b16 %v398, %v396
        %v429 = vpack.c.b16 %v399, %v397
        %v430 = vpack.c.b16 %v402, %v400
        %v431 = vpack.c.b16 %v403, %v401
        %v432 = vpack.c.b16 %v406, %v404
        %v433 = vpack.c.b16 %v407, %v405
        %v434 = vpack.c.b16 %v410, %v408
        %v435 = vpack.c.b16 %v411, %v409
        %v436 = vpack.c.b16 %v414, %v412
        %v437 = vpack.c.b16 %v415, %v413
        %v438 = vpack.c.b16 %v418, %v416
        %v439 = vpack.c.b16 %v419, %v417
        %v440 = vpack.c.b16 %v422, %v420
        %v441 = vpack.c.b16 %v423, %v421
        %v442 = vpack.c.b16 %v426, %v424
        %v443 = vpack.c.b16 %v427, %v425
        %460 = vmatpush.bf16.msra.mxu0 %v442
        %461 = vmatpush.bf16.msra.mxu0 %v440
        %462 = vmatpush.bf16.msra.mxu0 %v438
        %463 = vmatpush.bf16.msra.mxu0 %v436
        %464 = vmatpush.bf16.msra.mxu0 %v434
        %465 = vmatpush.bf16.msra.mxu0 %v432
        %466 = vmatpush.bf16.msra.mxu0 %v430
        %467 = vmatpush.bf16.msra.mxu0 %v428
        %468 = vmatmul.bf16.gmra.mxu0 %v348
        %v469 = vpop.f32.mrf.mxu0
        %v470 = vadd.f32 0.0, %v469
        %v471 = vpop.f32.mrf.mxu0
        %v472 = vadd.f32 0.0, %v471
        %473 = vmatmul.bf16.gmra.mxu0 %v349
        %v474 = vpop.f32.mrf.mxu0
        %v475 = vadd.f32 0.0, %v474
        %v476 = vpop.f32.mrf.mxu0
        %v477 = vadd.f32 0.0, %v476
        %478 = vmatmul.bf16.gmra.mxu0 %v350
        %v479 = vpop.f32.mrf.mxu0
        %v480 = vadd.f32 0.0, %v479
        %v481 = vpop.f32.mrf.mxu0
        %v482 = vadd.f32 0.0, %v481
        %483 = vmatmul.bf16.gmra.mxu0 %v351
        %v484 = vpop.f32.mrf.mxu0
        %v485 = vadd.f32 0.0, %v484
        %v486 = vpop.f32.mrf.mxu0
        %v487 = vadd.f32 0.0, %v486
        %488 = vmatmul.bf16.gmra.mxu0 %v352
        %v489 = vpop.f32.mrf.mxu0
        %v490 = vadd.f32 0.0, %v489
        %v491 = vpop.f32.mrf.mxu0
        %v492 = vadd.f32 0.0, %v491
        %493 = vmatmul.bf16.gmra.mxu0 %v353
        %v494 = vpop.f32.mrf.mxu0
        %v495 = vadd.f32 0.0, %v494
        %v496 = vpop.f32.mrf.mxu0
        %v497 = vadd.f32 0.0, %v496
        %498 = vmatmul.bf16.gmra.mxu0 %v354
        %v499 = vpop.f32.mrf.mxu0
        %v500 = vadd.f32 0.0, %v499
        %v501 = vpop.f32.mrf.mxu0
        %v502 = vadd.f32 0.0, %v501
        %503 = vmatmul.bf16.gmra.mxu0 %v355
        %v504 = vpop.f32.mrf.mxu0
        %v505 = vadd.f32 0.0, %v504
        %v506 = vpop.f32.mrf.mxu0
        %v507 = vadd.f32 0.0, %v506
        %508 = vmatmul.bf16.gmra.mxu0 %v356
        %v509 = vpop.f32.mrf.mxu0
        %v510 = vadd.f32 0.0, %v509
        %v511 = vpop.f32.mrf.mxu0
        %v512 = vadd.f32 0.0, %v511
        %513 = vmatmul.bf16.gmra.mxu0 %v357
        %v514 = vpop.f32.mrf.mxu0
        %v515 = vadd.f32 0.0, %v514
        %v516 = vpop.f32.mrf.mxu0
        %v517 = vadd.f32 0.0, %v516
        %518 = vmatmul.bf16.gmra.mxu0 %v358
        %v519 = vpop.f32.mrf.mxu0
        %v520 = vadd.f32 0.0, %v519
        %v521 = vpop.f32.mrf.mxu0
        %v522 = vadd.f32 0.0, %v521
        %523 = vmatmul.bf16.gmra.mxu0 %v359
        %v524 = vpop.f32.mrf.mxu0
        %v525 = vadd.f32 0.0, %v524
        %v526 = vpop.f32.mrf.mxu0
        %v527 = vadd.f32 0.0, %v526
        %528 = vmatmul.bf16.gmra.mxu0 %v360
        %v529 = vpop.f32.mrf.mxu0
        %v530 = vadd.f32 0.0, %v529
        %v531 = vpop.f32.mrf.mxu0
        %v532 = vadd.f32 0.0, %v531
        %533 = vmatmul.bf16.gmra.mxu0 %v361
        %v534 = vpop.f32.mrf.mxu0
        %v535 = vadd.f32 0.0, %v534
        %v536 = vpop.f32.mrf.mxu0
        %v537 = vadd.f32 0.0, %v536
        %538 = vmatmul.bf16.gmra.mxu0 %v362
        %v539 = vpop.f32.mrf.mxu0
        %v540 = vadd.f32 0.0, %v539
        %v541 = vpop.f32.mrf.mxu0
        %v542 = vadd.f32 0.0, %v541
        %543 = vmatmul.bf16.gmra.mxu0 %v363
        %v544 = vpop.f32.mrf.mxu0
        %v545 = vadd.f32 0.0, %v544
        %v546 = vpop.f32.mrf.mxu0
        %v547 = vadd.f32 0.0, %v546
        %548 = vdwg.mxu0
        %549 = vmatpush.bf16.msra.mxu0 %v443
        %550 = vmatpush.bf16.msra.mxu0 %v441
        %551 = vmatpush.bf16.msra.mxu0 %v439
        %552 = vmatpush.bf16.msra.mxu0 %v437
        %553 = vmatpush.bf16.msra.mxu0 %v435
        %554 = vmatpush.bf16.msra.mxu0 %v433
        %555 = vmatpush.bf16.msra.mxu0 %v431
        %556 = vmatpush.bf16.msra.mxu0 %v429
        %557 = vmatmul.bf16.gmra.mxu0 %v348
        %v558 = vpop.f32.mrf.mxu0
        %v559 = vadd.f32 0.0, %v558
        %v560 = vpop.f32.mrf.mxu0
        %v561 = vadd.f32 0.0, %v560
        %562 = vmatmul.bf16.gmra.mxu0 %v349
        %v563 = vpop.f32.mrf.mxu0
        %v564 = vadd.f32 0.0, %v563
        %v565 = vpop.f32.mrf.mxu0
        %v566 = vadd.f32 0.0, %v565
        %567 = vmatmul.bf16.gmra.mxu0 %v350
        %v568 = vpop.f32.mrf.mxu0
        %v569 = vadd.f32 0.0, %v568
        %v570 = vpop.f32.mrf.mxu0
        %v571 = vadd.f32 0.0, %v570
        %572 = vmatmul.bf16.gmra.mxu0 %v351
        %v573 = vpop.f32.mrf.mxu0
        %v574 = vadd.f32 0.0, %v573
        %v575 = vpop.f32.mrf.mxu0
        %v576 = vadd.f32 0.0, %v575
        %577 = vmatmul.bf16.gmra.mxu0 %v352
        %v578 = vpop.f32.mrf.mxu0
        %v579 = vadd.f32 0.0, %v578
        %v580 = vpop.f32.mrf.mxu0
        %v581 = vadd.f32 0.0, %v580
        %582 = vmatmul.bf16.gmra.mxu0 %v353
        %v583 = vpop.f32.mrf.mxu0
        %v584 = vadd.f32 0.0, %v583
        %v585 = vpop.f32.mrf.mxu0
        %v586 = vadd.f32 0.0, %v585
        %587 = vmatmul.bf16.gmra.mxu0 %v354
        %v588 = vpop.f32.mrf.mxu0
        %v589 = vadd.f32 0.0, %v588
        %v590 = vpop.f32.mrf.mxu0
        %v591 = vadd.f32 0.0, %v590
        %592 = vmatmul.bf16.gmra.mxu0 %v355
        %v593 = vpop.f32.mrf.mxu0
        %v594 = vadd.f32 0.0, %v593
        %v595 = vpop.f32.mrf.mxu0
        %v596 = vadd.f32 0.0, %v595
        %597 = vmatmul.bf16.gmra.mxu0 %v356
        %v598 = vpop.f32.mrf.mxu0
        %v599 = vadd.f32 0.0, %v598
        %v600 = vpop.f32.mrf.mxu0
        %v601 = vadd.f32 0.0, %v600
        %602 = vmatmul.bf16.gmra.mxu0 %v357
        %v603 = vpop.f32.mrf.mxu0
        %v604 = vadd.f32 0.0, %v603
        %v605 = vpop.f32.mrf.mxu0
        %v606 = vadd.f32 0.0, %v605
        %607 = vmatmul.bf16.gmra.mxu0 %v358
        %v608 = vpop.f32.mrf.mxu0
        %v609 = vadd.f32 0.0, %v608
        %v610 = vpop.f32.mrf.mxu0
        %v611 = vadd.f32 0.0, %v610
        %612 = vmatmul.bf16.gmra.mxu0 %v359
        %v613 = vpop.f32.mrf.mxu0
        %v614 = vadd.f32 0.0, %v613
        %v615 = vpop.f32.mrf.mxu0
        %v616 = vadd.f32 0.0, %v615
        %617 = vmatmul.bf16.gmra.mxu0 %v360
        %v618 = vpop.f32.mrf.mxu0
        %v619 = vadd.f32 0.0, %v618
        %v620 = vpop.f32.mrf.mxu0
        %v621 = vadd.f32 0.0, %v620
        %622 = vmatmul.bf16.gmra.mxu0 %v361
        %v623 = vpop.f32.mrf.mxu0
        %v624 = vadd.f32 0.0, %v623
        %v625 = vpop.f32.mrf.mxu0
        %v626 = vadd.f32 0.0, %v625
        %627 = vmatmul.bf16.gmra.mxu0 %v362
        %v628 = vpop.f32.mrf.mxu0
        %v629 = vadd.f32 0.0, %v628
        %v630 = vpop.f32.mrf.mxu0
        %v631 = vadd.f32 0.0, %v630
        %632 = vmatmul.bf16.gmra.mxu0 %v363
        %v633 = vpop.f32.mrf.mxu0
        %v634 = vadd.f32 0.0, %v633
        %v635 = vpop.f32.mrf.mxu0
        %v636 = vadd.f32 0.0, %v635
        %637 = vdwg.mxu0
        %p638 = scmp.eq.s32.totalorder %s30, 0
        // Predicated region
        $region37: #{tpu_custom_call.1} parent=27 // pred_check
          %p639 = pneg %p638
        $region38: #{tpu_custom_call.1} parent=27 // pred_check_branch
          %641 = sbr.rel (%p639) target = $region40
        $region39: #{tpu_custom_call.1} parent=27 // pred_region
          %642 = vst [vmem:[%s226] sm:$0xff] 0.0
          %643 = vst [vmem:[%s226 + $0x8] sm:$0xff] 0.0
          %644 = vst [vmem:[%s233] sm:$0xff] 0.0
          %645 = vst [vmem:[%s233 + $0x8] sm:$0xff] 0.0
        $region40: #{tpu_custom_call.1} parent=27 // pred_fallthru
          _
        %v646 = vld [vmem:[%s226] ss:$8 sm:$0x3]
        %v647 = vadd.f32 %v470, %v472
        %v648 = vadd.f32 %v647, %v475
        %v649 = vadd.f32 %v648, %v477
        %v650 = vadd.f32 %v649, %v480
        %v651 = vadd.f32 %v650, %v482
        %v652 = vadd.f32 %v651, %v485
        %v653 = vadd.f32 %v652, %v487
        %v654 = vadd.f32 %v653, %v490
        %v655 = vadd.f32 %v654, %v492
        %v656 = vadd.f32 %v655, %v495
        %v657 = vadd.f32 %v656, %v497
        %v658 = vadd.f32 %v657, %v500
        %v659 = vadd.f32 %v658, %v502
        %v660 = vadd.f32 %v659, %v505
        %v661 = vadd.f32 %v660, %v507
        %v662 = vadd.f32 %v661, %v510
        %v663 = vadd.f32 %v662, %v512
        %v664 = vadd.f32 %v663, %v515
        %v665 = vadd.f32 %v664, %v517
        %v666 = vadd.f32 %v665, %v520
        %v667 = vadd.f32 %v666, %v522
        %v668 = vadd.f32 %v667, %v525
        %v669 = vadd.f32 %v668, %v527
        %v670 = vadd.f32 %v669, %v530
        %v671 = vadd.f32 %v670, %v532
        %v672 = vadd.f32 %v671, %v535
        %v673 = vadd.f32 %v672, %v537
        %v674 = vadd.f32 %v673, %v540
        %v675 = vadd.f32 %v674, %v542
        %v676 = vadd.f32 %v675, %v545
        %v677 = vadd.f32 %v676, %v547
        %v678 = vrot.slane %v677, 4
        %v679 = vadd.f32 %v677, %v678
        %v680 = vrot.slane %v679, 2
        %v681 = vadd.f32 %v679, %v680
        %v682 = vrot.slane %v681, 1
        %v683 = vadd.f32 %v681, %v682
        %v684 = vadd.f32 %v559, %v561
        %v685 = vadd.f32 %v684, %v564
        %v686 = vadd.f32 %v685, %v566
        %v687 = vadd.f32 %v686, %v569
        %v688 = vadd.f32 %v687, %v571
        %v689 = vadd.f32 %v688, %v574
        %v690 = vadd.f32 %v689, %v576
        %v691 = vadd.f32 %v690, %v579
        %v692 = vadd.f32 %v691, %v581
        %v693 = vadd.f32 %v692, %v584
        %v694 = vadd.f32 %v693, %v586
        %v695 = vadd.f32 %v694, %v589
        %v696 = vadd.f32 %v695, %v591
        %v697 = vadd.f32 %v696, %v594
        %v698 = vadd.f32 %v697, %v596
        %v699 = vadd.f32 %v698, %v599
        %v700 = vadd.f32 %v699, %v601
        %v701 = vadd.f32 %v700, %v604
        %v702 = vadd.f32 %v701, %v606
        %v703 = vadd.f32 %v702, %v609
        %v704 = vadd.f32 %v703, %v611
        %v705 = vadd.f32 %v704, %v614
        %v706 = vadd.f32 %v705, %v616
        %v707 = vadd.f32 %v706, %v619
        %v708 = vadd.f32 %v707, %v621
        %v709 = vadd.f32 %v708, %v624
        %v710 = vadd.f32 %v709, %v626
        %v711 = vadd.f32 %v710, %v629
        %v712 = vadd.f32 %v711, %v631
        %v713 = vadd.f32 %v712, %v634
        %v714 = vadd.f32 %v713, %v636
        %v715 = vrot.slane %v714, 4
        %v716 = vadd.f32 %v714, %v715
        %v717 = vrot.slane %v716, 2
        %v718 = vadd.f32 %v716, %v717
        %v719 = vrot.slane %v718, 1
        %v720 = vadd.f32 %v718, %v719
        %v723 = vrot.slane %v720, 7
        %vm724 = vcmask 1040384
        %v725 = vsel %vm724, %v683, %v723
        %v727 = vadd.f32 %v646, %v725
        %v728 = vlaneseq
        %vm729 = vcmp.ge.s32.totalorder %v728, 0
        %vm730 = vcmp.lt.s32.totalorder %v728, 256
        %vm731 = vmand %vm729, %vm730
        %732 = vst.msk [vmem:[%s226] ss:$8 sm:$0x3] %vm731, %v727
        %733 = vst.msk [vmem:[%s226] ss:$8 sm:$0x0] %vm731, %v727
        %v734 = vld [vmem:[%s233] ss:$8 sm:$0x3]
        %v735 = vmul.f32 %v470, %v470
        %v736 = vmul.f32 %v559, %v559
        %v737 = vmul.f32 %v472, %v472
        %v738 = vmul.f32 %v561, %v561
        %v739 = vmul.f32 %v475, %v475
        %v740 = vmul.f32 %v564, %v564
        %v741 = vmul.f32 %v477, %v477
        %v742 = vmul.f32 %v566, %v566
        %v743 = vmul.f32 %v480, %v480
        %v744 = vmul.f32 %v569, %v569
        %v745 = vmul.f32 %v482, %v482
        %v746 = vmul.f32 %v571, %v571
        %v747 = vmul.f32 %v485, %v485
        %v748 = vmul.f32 %v574, %v574
        %v749 = vmul.f32 %v487, %v487
        %v750 = vmul.f32 %v576, %v576
        %v751 = vmul.f32 %v490, %v490
        %v752 = vmul.f32 %v579, %v579
        %v753 = vmul.f32 %v492, %v492
        %v754 = vmul.f32 %v581, %v581
        %v755 = vmul.f32 %v495, %v495
        %v756 = vmul.f32 %v584, %v584
        %v757 = vmul.f32 %v497, %v497
        %v758 = vmul.f32 %v586, %v586
        %v759 = vmul.f32 %v500, %v500
        %v760 = vmul.f32 %v589, %v589
        %v761 = vmul.f32 %v502, %v502
        %v762 = vmul.f32 %v591, %v591
        %v763 = vmul.f32 %v505, %v505
        %v764 = vmul.f32 %v594, %v594
        %v765 = vmul.f32 %v507, %v507
        %v766 = vmul.f32 %v596, %v596
        %v767 = vmul.f32 %v510, %v510
        %v768 = vmul.f32 %v599, %v599
        %v769 = vmul.f32 %v512, %v512
        %v770 = vmul.f32 %v601, %v601
        %v771 = vmul.f32 %v515, %v515
        %v772 = vmul.f32 %v604, %v604
        %v773 = vmul.f32 %v517, %v517
        %v774 = vmul.f32 %v606, %v606
        %v775 = vmul.f32 %v520, %v520
        %v776 = vmul.f32 %v609, %v609
        %v777 = vmul.f32 %v522, %v522
        %v778 = vmul.f32 %v611, %v611
        %v779 = vmul.f32 %v525, %v525
        %v780 = vmul.f32 %v614, %v614
        %v781 = vmul.f32 %v527, %v527
        %v782 = vmul.f32 %v616, %v616
        %v783 = vmul.f32 %v530, %v530
        %v784 = vmul.f32 %v619, %v619
        %v785 = vmul.f32 %v532, %v532
        %v786 = vmul.f32 %v621, %v621
        %v787 = vmul.f32 %v535, %v535
        %v788 = vmul.f32 %v624, %v624
        %v789 = vmul.f32 %v537, %v537
        %v790 = vmul.f32 %v626, %v626
        %v791 = vmul.f32 %v540, %v540
        %v792 = vmul.f32 %v629, %v629
        %v793 = vmul.f32 %v542, %v542
        %v794 = vmul.f32 %v631, %v631
        %v795 = vmul.f32 %v545, %v545
        %v796 = vmul.f32 %v634, %v634
        %v797 = vmul.f32 %v547, %v547
        %v798 = vmul.f32 %v636, %v636
        %v799 = vadd.f32 %v735, %v737
        %v800 = vadd.f32 %v799, %v739
        %v801 = vadd.f32 %v800, %v741
        %v802 = vadd.f32 %v801, %v743
        %v803 = vadd.f32 %v802, %v745
        %v804 = vadd.f32 %v803, %v747
        %v805 = vadd.f32 %v804, %v749
        %v806 = vadd.f32 %v805, %v751
        %v807 = vadd.f32 %v806, %v753
        %v808 = vadd.f32 %v807, %v755
        %v809 = vadd.f32 %v808, %v757
        %v810 = vadd.f32 %v809, %v759
        %v811 = vadd.f32 %v810, %v761
        %v812 = vadd.f32 %v811, %v763
        %v813 = vadd.f32 %v812, %v765
        %v814 = vadd.f32 %v813, %v767
        %v815 = vadd.f32 %v814, %v769
        %v816 = vadd.f32 %v815, %v771
        %v817 = vadd.f32 %v816, %v773
        %v818 = vadd.f32 %v817, %v775
        %v819 = vadd.f32 %v818, %v777
        %v820 = vadd.f32 %v819, %v779
        %v821 = vadd.f32 %v820, %v781
        %v822 = vadd.f32 %v821, %v783
        %v823 = vadd.f32 %v822, %v785
        %v824 = vadd.f32 %v823, %v787
        %v825 = vadd.f32 %v824, %v789
        %v826 = vadd.f32 %v825, %v791
        %v827 = vadd.f32 %v826, %v793
        %v828 = vadd.f32 %v827, %v795
        %v829 = vadd.f32 %v828, %v797
        %v830 = vrot.slane %v829, 4
        %v831 = vadd.f32 %v829, %v830
        %v832 = vrot.slane %v831, 2
        %v833 = vadd.f32 %v831, %v832
        %v834 = vrot.slane %v833, 1
        %v835 = vadd.f32 %v833, %v834
        %v836 = vadd.f32 %v736, %v738
        %v837 = vadd.f32 %v836, %v740
        %v838 = vadd.f32 %v837, %v742
        %v839 = vadd.f32 %v838, %v744
        %v840 = vadd.f32 %v839, %v746
        %v841 = vadd.f32 %v840, %v748
        %v842 = vadd.f32 %v841, %v750
        %v843 = vadd.f32 %v842, %v752
        %v844 = vadd.f32 %v843, %v754
        %v845 = vadd.f32 %v844, %v756
        %v846 = vadd.f32 %v845, %v758
        %v847 = vadd.f32 %v846, %v760
        %v848 = vadd.f32 %v847, %v762
        %v849 = vadd.f32 %v848, %v764
        %v850 = vadd.f32 %v849, %v766
        %v851 = vadd.f32 %v850, %v768
        %v852 = vadd.f32 %v851, %v770
        %v853 = vadd.f32 %v852, %v772
        %v854 = vadd.f32 %v853, %v774
        %v855 = vadd.f32 %v854, %v776
        %v856 = vadd.f32 %v855, %v778
        %v857 = vadd.f32 %v856, %v780
        %v858 = vadd.f32 %v857, %v782
        %v859 = vadd.f32 %v858, %v784
        %v860 = vadd.f32 %v859, %v786
        %v861 = vadd.f32 %v860, %v788
        %v862 = vadd.f32 %v861, %v790
        %v863 = vadd.f32 %v862, %v792
        %v864 = vadd.f32 %v863, %v794
        %v865 = vadd.f32 %v864, %v796
        %v866 = vadd.f32 %v865, %v798
        %v867 = vrot.slane %v866, 4
        %v868 = vadd.f32 %v866, %v867
        %v869 = vrot.slane %v868, 2
        %v870 = vadd.f32 %v868, %v869
        %v871 = vrot.slane %v870, 1
        %v872 = vadd.f32 %v870, %v871
        %v875 = vrot.slane %v872, 7
        %v876 = vsel %vm724, %v835, %v875
        %v878 = vadd.f32 %v734, %v876
        %879 = vst.msk [vmem:[%s233] ss:$8 sm:$0x3] %vm731, %v878
        %880 = vst.msk [vmem:[%s233] ss:$8 sm:$0x0] %vm731, %v878
        %s881 = sand.u32 %s94, 1
        %s882 = scalar_lea.sflag [#allocation4], %s881
        %s883 = sand.u32 %s94, 1
        %s884 = smul.addr %s883, 16
        %s885 = scalar_lea.vmem [#allocation7], %s884
        %s886 = sand.u32 %s120, 1
        %s887 = scalar_lea.sflag [#allocation9], %s886
        %s888 = sand.u32 %s120, 1
        %s889 = smul.addr %s888, 16
        %s890 = scalar_lea.vmem [#allocation8], %s889
        // Predicated region
        $region41: #{tpu_custom_call.1} parent=27 // pred_check
          %p891 = pneg %p104
        $region42: #{tpu_custom_call.1} parent=27 // pred_check_branch
          %893 = sbr.rel (%p891) target = $region44
        $region43: #{tpu_custom_call.1} parent=27 // pred_region
          %895 = vsyncadd %s882, 0
          %s896 = smul.addr %s29, 2
          %s897 = smul.addr %s896, 8
          %s898 = scalar_lea.hbm %s2, %s897
          %s900 = sshll.u32 %s885, 4
          %s901 = int_to_ptr.vmem [resolvable:$true] %s900
          %s902 = sshll.u32 %s898, 4
          %s903 = int_to_ptr.hbm [resolvable:$true] %s902
          %905 = dma.vmem_to_hbm [thread:$0]  %s901, 256, %s903, %s882
        $region44: #{tpu_custom_call.1} parent=27 // pred_fallthru
          _
        // Predicated region
        $region45: #{tpu_custom_call.1} parent=27 // pred_check
          %p906 = pneg %p130
        $region46: #{tpu_custom_call.1} parent=27 // pred_check_branch
          %908 = sbr.rel (%p906) target = $region48
        $region47: #{tpu_custom_call.1} parent=27 // pred_region
          %910 = vsyncadd %s887, 0
          %s911 = smul.addr %s29, 2
          %s912 = smul.addr %s911, 8
          %s913 = scalar_lea.hbm %s3, %s912
          %s915 = sshll.u32 %s890, 4
          %s916 = int_to_ptr.vmem [resolvable:$true] %s915
          %s917 = sshll.u32 %s913, 4
          %s918 = int_to_ptr.hbm [resolvable:$true] %s917
          %920 = dma.vmem_to_hbm [thread:$0]  %s916, 256, %s918, %s887
        $region48: #{tpu_custom_call.1} parent=27 // pred_fallthru
          _
      $region28: #{tpu_custom_call.1} parent=5 // pred_fallthru
        _
      %p921 = scmp.le.s32.totalorder 2, %s20
      // Predicated region
      $region49: #{tpu_custom_call.1} parent=5 // pred_check
        %p922 = pneg %p921
      $region50: #{tpu_custom_call.1} parent=5 // pred_check_branch
        %924 = sbr.rel (%p922) target = $region52
      $region51: #{tpu_custom_call.1} parent=5 // pred_region
        %s925 = ssub.s32 %s20, 2
        // Predicated region
        $region53: #{tpu_custom_call.1} parent=51 // pred_check
          %p926 = pneg %p110
        $region54: #{tpu_custom_call.1} parent=51 // pred_check_branch
          %928 = sbr.rel (%p926) target = $region56
        $region55: #{tpu_custom_call.1} parent=51 // pred_region
          %s929 = sand.u32 %s95, 1
          %s930 = scalar_lea.sflag [#allocation4], %s929
          %s931 = sand.u32 %s95, 1
          %s932 = smul.addr %s931, 16
          %s933 = scalar_lea.vmem [#allocation7], %s932
          %935 = dma.done %s930, 256
        $region56: #{tpu_custom_call.1} parent=51 // pred_fallthru
          _
        // Predicated region
        $region57: #{tpu_custom_call.1} parent=51 // pred_check
          %p936 = pneg %p136
        $region58: #{tpu_custom_call.1} parent=51 // pred_check_branch
          %938 = sbr.rel (%p936) target = $region60
        $region59: #{tpu_custom_call.1} parent=51 // pred_region
          %s939 = sand.u32 %s121, 1
          %s940 = scalar_lea.sflag [#allocation9], %s939
          %s941 = sand.u32 %s121, 1
          %s942 = smul.addr %s941, 16
          %s943 = scalar_lea.vmem [#allocation8], %s942
          %945 = dma.done %s940, 256
        $region60: #{tpu_custom_call.1} parent=51 // pred_fallthru
          _
      $region52: #{tpu_custom_call.1} parent=5 // pred_fallthru
        _
    $region6: #{tpu_custom_call.1} parent=1 // loop_footer
      %s24 = sadd.s32 1, %s20
    $region7: #{tpu_custom_call.1} parent=1 // loop_footer_branch
      %19 = sbr.rel target = $region3
    $region8: #{tpu_custom_call.1} parent=1 // loop_exit
      _
    %946 = vsyncpa [#allocation3], 1
    %s947 = scalar_lea.sflag [#allocation3], 1
    %948 = vsyncpa %s947, 1
    %949 = vsyncpa [#allocation6], 1
    %950 = vsyncpa [#allocation4], 1
    %s951 = scalar_lea.sflag [#allocation4], 1
    %952 = vsyncpa %s951, 1
    %953 = vsyncpa [#allocation9], 1
    %s954 = scalar_lea.sflag [#allocation9], 1
    %955 = vsyncpa %s954, 1

</llo_original>
